<compile_context>
chip_gen: v7x
topology: tpu7x:2x2x1
jax: 0.10.0
libtpu: 0.0.40
codegen_flags: <defaults>
</compile_context>

<pallas_src>
import functools

import numpy as np
import jax
import jax.numpy as jnp
from jax.experimental import pallas as pl
from jax.experimental.pallas import tpu as pltpu


class HaarWavelet:
    """Deterministic 2x2 orthonormal Haar wavelet: 4 sub-bands."""
    h = 2
    w = 2
    factor = 2
    multiplier = 4
    kernels = [
        [[0.5,  0.5], [ 0.5,  0.5]],   # LL (low-pass)
        [[0.5, -0.5], [ 0.5, -0.5]],   # LH
        [[0.5,  0.5], [-0.5, -0.5]],   # HL
        [[0.5, -0.5], [-0.5,  0.5]],   # HH
    ]


# ----------------------------------------------------------------------------
# Analysis matrices (banded, per width tile)
# ----------------------------------------------------------------------------
def _analysis_pair(wavelet, wt, dtype):
    """Banded analysis matrices for ONE width tile of wt output columns.

    Gt/Gb have shape (2*wt, m*wt): column s*wt + j applies the wavelet's
    top-row / bottom-row taps to input columns (2j, 2j+1) of the tile and
    produces sub-band s.  All width tiles share the same matrices because
    windows are non-overlapping (stride == window)."""
    m = wavelet.multiplier
    k = np.asarray(wavelet.kernels, dtype=np.float32)            # (m, 2, 2)
    gt = np.zeros((2 * wt, m * wt), dtype=np.float32)
    gb = np.zeros((2 * wt, m * wt), dtype=np.float32)
    for s in range(m):
        for dw in range(2):
            for j in range(wt):
                gt[2 * j + dw, s * wt + j] = k[s, 0, dw]
                gb[2 * j + dw, s * wt + j] = k[s, 1, dw]
    return jnp.asarray(gt, dtype=dtype), jnp.asarray(gb, dtype=dtype)


# ----------------------------------------------------------------------------
# Kernels
# ----------------------------------------------------------------------------
def _dwt_core(top, bot, gt_ref, gb_ref, low_ref, high_ref, *, m, wt, bt, th):
    # top/bot: (bt*th, 2*wt) slabs (native dtype); one fused matmul per slab,
    # f32 accumulation, all m sub-bands produced in a single wide result.
    y = jnp.dot(top, gt_ref[...], preferred_element_type=jnp.float32)
    y = y + jnp.dot(bot, gb_ref[...], preferred_element_type=jnp.float32)
    y = y.astype(low_ref.dtype)                                   # (bt*th, m*wt)
    if bt == 1:
        low_ref[0] = y[:, :wt]
        for s in range(1, m):                                     # static unroll
            high_ref[0, s - 1] = y[:, s * wt:(s + 1) * wt]
    else:
        for bi in range(bt):                                      # static unroll
            rows = y[bi * th:(bi + 1) * th]
            low_ref[bi] = rows[:, :wt]
            for s in range(1, m):
                high_ref[bi, s - 1] = rows[:, s * wt:(s + 1) * wt]


def _dwt_kernel_split(gt_ref, gb_ref, top_ref, bot_ref, low_ref, high_ref,
                      *, m, wt, bt, th):
    # top_ref/bot_ref: (bt, th, 2*wt) -- same HBM array, two windows.
    if bt == 1:
        top = top_ref[0]
        bot = bot_ref[0]
    else:
        top = top_ref[...].reshape(bt * th, 2 * wt)
        bot = bot_ref[...].reshape(bt * th, 2 * wt)
    _dwt_core(top, bot, gt_ref, gb_ref, low_ref, high_ref,
              m=m, wt=wt, bt=bt, th=th)


def _dwt_kernel_combined(gt_ref, gb_ref, x_ref, low_ref, high_ref,
                         *, m, wt, bt, th):
    # x_ref: (bt, th, 2*W) full-width row-pair block (small / odd widths only).
    if bt == 1:
        blk = x_ref[0]
    else:
        blk = x_ref[...].reshape(bt * th, x_ref.shape[-1])
    half = blk.shape[-1] // 2
    top = blk[:, :half]
    bot = blk[:, half:]
    _dwt_core(top, bot, gt_ref, gb_ref, low_ref, high_ref,
              m=m, wt=wt, bt=bt, th=th)


# ----------------------------------------------------------------------------
# Wrapper
# ----------------------------------------------------------------------------
def _tile_bytes(bt, th, wt, m, itemsize):
    """Per-grid-step VMEM: double-buffered input/output blocks + f32 temp."""
    x_blk = 2 * bt * th * (2 * wt) * itemsize * 2     # top + bot, 2 buffers
    low_blk = 2 * bt * th * wt * itemsize             # 2 buffers
    high_blk = 2 * bt * (m - 1) * th * wt * itemsize  # 2 buffers
    y_tmp = bt * th * m * wt * 4                      # f32 accumulator value
    return x_blk + low_blk + high_blk + y_tmp


def _const_spec(shape, index_map):
    """BlockSpec for a grid-invariant operand; single-buffered when supported."""
    try:
        return pl.BlockSpec(shape, index_map,
                            pipeline_mode=pl.Buffered(buffer_count=1))
    except Exception:
        return pl.BlockSpec(shape, index_map)


def dwt_forward(x, wavelet=HaarWavelet, max_rows_per_block=None):
    N, C, H, W = x.shape
    Hw, Ww, m = wavelet.h, wavelet.w, wavelet.multiplier
    assert H % Hw == 0 and W % Ww == 0, \
        '({},{}) not dividing by {} nicely'.format(H, W, wavelet.factor)
    # TODO(synk): the fused row-pair view assumes non-overlapping 2x2 windows
    # (stride == window, as for Haar); overlapping wavelets would need im2col.
    assert Hw == 2 and Ww == 2, "fused kernel supports 2x2 (stride==window) wavelets"
    assert m >= 2

    Hout, Wout = H // 2, W // 2
    B = N * C

    # bf16 stays bf16 (MXU-native, half the HBM traffic); everything else -> f32.
    if x.dtype not in (jnp.float32, jnp.bfloat16):
        x = x.astype(jnp.float32)
    dtype = x.dtype
    itemsize = dtype.itemsize

    # ---- width tiling / path selection --------------------------------------
    if Wout % 128 == 0:
        wt, split = (256 if Wout % 256 == 0 else 128), True
    elif Wout % 64 == 0 and Wout <= 384:
        wt, split = Wout, True          # single width tile, lane-aligned slabs
    else:
        # TODO(synk): widths whose half has no 64-aligned tile fall back to one
        # full-width block (analysis matrix grows O(Wout^2) VMEM in that case).
        wt, split = Wout, False
    wc = Wout // wt                      # exact by construction

    # ---- generation-aware VMEM budget ---------------------------------------
    vmem_cap = 64 << 20                  # conservative default (v7x per-TC VMEM)
    try:
        vmem_cap = int(pltpu.get_tpu_info().vmem_capacity_bytes)
    except Exception:
        pass
    vmem_limit = int(max(32 << 20, min(vmem_cap * 3 // 4, 112 << 20)))
    g_bytes = 2 * (2 * wt) * (m * wt) * itemsize      # Gt + Gb (single-buffered)
    budget = max(2 << 20, (vmem_limit - g_bytes) // 2)

    # ---- row tile (multiple of 8 / 16, ragged last block via cdiv) ----------
    step = 16 if dtype == jnp.bfloat16 else 8
    per_row = _tile_bytes(1, 1, wt, m, itemsize)
    th = min(Hout, max(1, budget // per_row), 1024)
    if max_rows_per_block is not None:
        th = min(th, max_rows_per_block)
    if th < Hout:
        th = max(step, (th // step) * step)
        th = min(th, Hout)
    rc = -(-Hout // th)

    # ---- batch tile: amortize per-step overhead for tiny (late-level) images -
    bt = 1
    if rc == 1 and wc == 1 and B > 1 and th % 8 == 0:
        per_img = _tile_bytes(1, th, wt, m, itemsize)
        bt = max(1, min(B, budget // max(per_img, 1)))
        bt = min(bt, -(-B // 2))         # keep >=2 grid steps (v7x has 2 TCs)
    bc = -(-B // bt)

    grid = (bc, rc, wc)

    gt, gb = _analysis_pair(wavelet, wt, dtype)
    g_spec = _const_spec((2 * wt, m * wt), lambda b, r, w: (0, 0))
    low_spec = pl.BlockSpec((bt, th, wt), lambda b, r, w: (b, r, w))
    high_spec = pl.BlockSpec((bt, m - 1, th, wt), lambda b, r, w: (b, 0, r, w))
    out_shape = (jax.ShapeDtypeStruct((B, Hout, Wout), dtype),
                 jax.ShapeDtypeStruct((B, m - 1, Hout, Wout), dtype))
    cparams = pltpu.CompilerParams(
        dimension_semantics=("parallel", "parallel", "parallel"),
        vmem_limit_bytes=vmem_limit)

    # Free view: row ho holds [input row 2ho | input row 2ho+1] concatenated.
    xv = x.reshape(B, Hout, 2 * W)

    if split:
        top_spec = pl.BlockSpec((bt, th, 2 * wt), lambda b, r, w: (b, r, w))
        bot_spec = pl.BlockSpec((bt, th, 2 * wt), lambda b, r, w: (b, r, w + wc))
        kernel = functools.partial(_dwt_kernel_split, m=m, wt=wt, bt=bt, th=th)
        in_specs = [g_spec, g_spec, top_spec, bot_spec]
        args = (gt, gb, xv, xv)
    else:
        x_spec = pl.BlockSpec((bt, th, 2 * W), lambda b, r, w: (b, r, 0))
        kernel = functools.partial(_dwt_kernel_combined, m=m, wt=wt, bt=bt, th=th)
        in_specs = [g_spec, g_spec, x_spec]
        args = (gt, gb, xv)

    low, high = pl.pallas_call(
        kernel,
        out_shape=out_shape,
        grid_spec=pltpu.PrefetchScalarGridSpec(
            num_scalar_prefetch=0,
            grid=grid,
            in_specs=in_specs,
            out_specs=[low_spec, high_spec]),
        compiler_params=cparams,
    )(*args)

    # Only free reshapes below (outputs already in final layout).
    low = low.reshape(N, C, Hout, Wout)
    high = high.reshape(N, C * (m - 1), Hout, Wout)
    return {'low': low, 'high': high}


# ----------------------------------------------------------------------------
# Pure-JAX reference (replicates the PyTorch forward exactly)
# ----------------------------------------------------------------------------
def dwt_reference(x, wavelet=HaarWavelet):
    N, C, H, W = x.shape
    Hw, Ww, m = wavelet.h, wavelet.w, wavelet.multiplier
    k = np.zeros((C * m, C, Hw, Ww), dtype=np.float32)
    for i in range(C):
        for j in range(m):
            k[i * m + j, i] = np.asarray(wavelet.kernels[j], dtype=np.float32)
    y = jax.lax.conv_general_dilated(
        x.astype(jnp.float32), jnp.asarray(k),
        window_strides=(2, 2), padding='VALID',
        dimension_numbers=('NCHW', 'OIHW', 'NCHW'))
    low = jnp.concatenate([y[:, i * m:i * m + 1] for i in range(C)], axis=1)
    high = jnp.concatenate([y[:, i * m + 1:i * m + m] for i in range(C)], axis=1)
    return {'low': low, 'high': high}


if __name__ == "__main__":
    root = jax.random.PRNGKey(0)
    k1, k2, k3 = jax.random.split(root, 3)

    def check(x, out, rtol=1e-5, atol=1e-5):
        ref = dwt_reference(x)
        np.testing.assert_allclose(np.asarray(out['low'], np.float32),
                                   np.asarray(ref['low'], np.float32),
                                   rtol=rtol, atol=atol)
        np.testing.assert_allclose(np.asarray(out['high'], np.float32),
                                   np.asarray(ref['high'], np.float32),
                                   rtol=rtol, atol=atol)

    # 1) Spec shape: combined-input path, batched grid steps (Bt>1).
    x1 = jax.random.normal(k1, (2, 4, 16, 16), dtype=jnp.float32)
    out1 = jax.tree_util.tree_map(jax.block_until_ready, dwt_forward(x1))
    assert out1['low'].shape == (2, 4, 8, 8)
    assert out1['high'].shape == (2, 12, 8, 8)
    check(x1, out1)

    # 2) Split (two-slab) path, Bt=2 batching, single width tile.
    x2 = jax.random.normal(k2, (2, 2, 16, 128), dtype=jnp.float32)
    out2 = jax.tree_util.tree_map(jax.block_until_ready, dwt_forward(x2))
    check(x2, out2)

    # 3) Split path with multiple width tiles (wt=128, 3 tiles).
    x3 = jax.random.normal(k3, (1, 1, 16, 768), dtype=jnp.float32)
    out3 = jax.tree_util.tree_map(jax.block_until_ready, dwt_forward(x3))
    check(x3, out3)

    # 4) Ragged row tiling (Hout=12, th=8 -> partial last row block).
    x4 = jax.random.normal(k1, (1, 2, 24, 128), dtype=jnp.float32)
    out4 = jax.tree_util.tree_map(jax.block_until_ready,
                                  dwt_forward(x4, max_rows_per_block=8))
    check(x4, out4)

    # 5) bf16 in -> bf16 out (f32 MXU accumulation), loose tolerance.
    x5 = jax.random.normal(k2, (2, 2, 16, 128), dtype=jnp.bfloat16)
    out5 = jax.tree_util.tree_map(jax.block_until_ready, dwt_forward(x5))
    assert out5['low'].dtype == jnp.bfloat16 and out5['high'].dtype == jnp.bfloat16
    check(x5, out5, rtol=2e-2, atol=2e-2)

    print("KERNEL_OK")
</pallas_src>

<mosaic_0001>
module attributes {stable_mosaic.version = 11 : i64} {
  func.func @_dwt_kernel_combined(%arg0: i32, %arg1: i32, %arg2: i32, %arg3: memref<16x32xf32, #tpu.memory_space<vmem>>, %arg4: memref<16x32xf32, #tpu.memory_space<vmem>>, %arg5: memref<4x8x32xf32, #tpu.memory_space<vmem>>, %arg6: memref<4x8x8xf32, #tpu.memory_space<vmem>>, %arg7: memref<4x3x8x8xf32, #tpu.memory_space<vmem>>) attributes {dimension_semantics = [#tpu.dimension_semantics<parallel>, #tpu.dimension_semantics<parallel>, #tpu.dimension_semantics<parallel>], iteration_bounds = array<i64: 2, 1, 1>, scalar_prefetch = 0 : i64, scratch_operands = 0 : i64, tpu.core_type = #tpu.core_type<tc>, window_params = [{pipeline_mode = #tpu.pipeline_mode<synchronous>, transform_indices = @transform_0, window_bounds = array<i64: 16, 32>}, {pipeline_mode = #tpu.pipeline_mode<synchronous>, transform_indices = @transform_1, window_bounds = array<i64: 16, 32>}, {transform_indices = @transform_2, window_bounds = array<i64: 4, 8, 32>}, {transform_indices = @transform_3, window_bounds = array<i64: 4, 8, 8>}, {transform_indices = @transform_4, window_bounds = array<i64: 4, 3, 8, 8>}]} {
    %c0 = arith.constant 0 : index
    %c0_0 = arith.constant 0 : index
    %c0_1 = arith.constant 0 : index
    %0 = vector.load %arg5[%c0, %c0_0, %c0_1] : memref<4x8x32xf32, #tpu.memory_space<vmem>>, vector<4x8x32xf32>
    %1 = vector.shape_cast %0 : vector<4x8x32xf32> to vector<32x32xf32>
    %2 = vector.extract_strided_slice %1 {offsets = [0, 0], sizes = [32, 16], strides = [1, 1]} : vector<32x32xf32> to vector<32x16xf32>
    %3 = vector.extract_strided_slice %1 {offsets = [0, 16], sizes = [32, 16], strides = [1, 1]} : vector<32x32xf32> to vector<32x16xf32>
    %c0_2 = arith.constant 0 : index
    %c0_3 = arith.constant 0 : index
    %4 = vector.load %arg3[%c0_2, %c0_3] : memref<16x32xf32, #tpu.memory_space<vmem>>, vector<16x32xf32>
    %cst = arith.constant dense<0.000000e+00> : vector<32x32xf32>
    %5 = tpu.matmul %2, %4, %cst {dimension_numbers = #tpu.dot_dimension_numbers<[1], [0], [0], [1], [0, 0, 1, 1], [], []>} : vector<32x16xf32>, vector<16x32xf32>, vector<32x32xf32> -> vector<32x32xf32>
    %c0_4 = arith.constant 0 : index
    %c0_5 = arith.constant 0 : index
    %6 = vector.load %arg4[%c0_4, %c0_5] : memref<16x32xf32, #tpu.memory_space<vmem>>, vector<16x32xf32>
    %cst_6 = arith.constant dense<0.000000e+00> : vector<32x32xf32>
    %7 = tpu.matmul %3, %6, %cst_6 {dimension_numbers = #tpu.dot_dimension_numbers<[1], [0], [0], [1], [0, 0, 1, 1], [], []>} : vector<32x16xf32>, vector<16x32xf32>, vector<32x32xf32> -> vector<32x32xf32>
    %8 = arith.addf %5, %7 : vector<32x32xf32>
    %9 = vector.extract_strided_slice %8 {offsets = [0, 0], sizes = [8, 32], strides = [1, 1]} : vector<32x32xf32> to vector<8x32xf32>
    %10 = vector.extract_strided_slice %9 {offsets = [0, 0], sizes = [8, 8], strides = [1, 1]} : vector<8x32xf32> to vector<8x8xf32>
    %c0_7 = arith.constant 0 : index
    %c0_8 = arith.constant 0 : index
    %c0_9 = arith.constant 0 : index
    %11 = vector.load %arg6[%c0_7, %c0_8, %c0_9] : memref<4x8x8xf32, #tpu.memory_space<vmem>>, vector<1x8x8xf32>
    %12 = vector.shape_cast %11 : vector<1x8x8xf32> to vector<8x8xf32>
    %13 = vector.shape_cast %10 : vector<8x8xf32> to vector<1x8x8xf32>
    tpu.vector_store %arg6[%c0_7, %c0_8, %c0_9], %13 {strides = array<i32>} : memref<4x8x8xf32, #tpu.memory_space<vmem>>, vector<1x8x8xf32>,
    %14 = vector.extract_strided_slice %9 {offsets = [0, 8], sizes = [8, 8], strides = [1, 1]} : vector<8x32xf32> to vector<8x8xf32>
    %c0_10 = arith.constant 0 : index
    %c0_11 = arith.constant 0 : index
    %c0_12 = arith.constant 0 : index
    %c0_13 = arith.constant 0 : index
    %15 = vector.load %arg7[%c0_10, %c0_11, %c0_12, %c0_13] : memref<4x3x8x8xf32, #tpu.memory_space<vmem>>, vector<1x1x8x8xf32>
    %16 = vector.shape_cast %15 : vector<1x1x8x8xf32> to vector<8x8xf32>
    %17 = vector.shape_cast %14 : vector<8x8xf32> to vector<1x1x8x8xf32>
    tpu.vector_store %arg7[%c0_10, %c0_11, %c0_12, %c0_13], %17 {strides = array<i32>} : memref<4x3x8x8xf32, #tpu.memory_space<vmem>>, vector<1x1x8x8xf32>,
    %18 = vector.extract_strided_slice %9 {offsets = [0, 16], sizes = [8, 8], strides = [1, 1]} : vector<8x32xf32> to vector<8x8xf32>
    %c0_14 = arith.constant 0 : index
    %c1 = arith.constant 1 : index
    %c0_15 = arith.constant 0 : index
    %c0_16 = arith.constant 0 : index
    %19 = vector.load %arg7[%c0_14, %c1, %c0_15, %c0_16] : memref<4x3x8x8xf32, #tpu.memory_space<vmem>>, vector<1x1x8x8xf32>
    %20 = vector.shape_cast %19 : vector<1x1x8x8xf32> to vector<8x8xf32>
    %21 = vector.shape_cast %18 : vector<8x8xf32> to vector<1x1x8x8xf32>
    tpu.vector_store %arg7[%c0_14, %c1, %c0_15, %c0_16], %21 {strides = array<i32>} : memref<4x3x8x8xf32, #tpu.memory_space<vmem>>, vector<1x1x8x8xf32>,
    %22 = vector.extract_strided_slice %9 {offsets = [0, 24], sizes = [8, 8], strides = [1, 1]} : vector<8x32xf32> to vector<8x8xf32>
    %c0_17 = arith.constant 0 : index
    %c2 = arith.constant 2 : index
    %c0_18 = arith.constant 0 : index
    %c0_19 = arith.constant 0 : index
    %23 = vector.load %arg7[%c0_17, %c2, %c0_18, %c0_19] : memref<4x3x8x8xf32, #tpu.memory_space<vmem>>, vector<1x1x8x8xf32>
    %24 = vector.shape_cast %23 : vector<1x1x8x8xf32> to vector<8x8xf32>
    %25 = vector.shape_cast %22 : vector<8x8xf32> to vector<1x1x8x8xf32>
    tpu.vector_store %arg7[%c0_17, %c2, %c0_18, %c0_19], %25 {strides = array<i32>} : memref<4x3x8x8xf32, #tpu.memory_space<vmem>>, vector<1x1x8x8xf32>,
    %26 = vector.extract_strided_slice %8 {offsets = [8, 0], sizes = [8, 32], strides = [1, 1]} : vector<32x32xf32> to vector<8x32xf32>
    %27 = vector.extract_strided_slice %26 {offsets = [0, 0], sizes = [8, 8], strides = [1, 1]} : vector<8x32xf32> to vector<8x8xf32>
    %c1_20 = arith.constant 1 : index
    %c0_21 = arith.constant 0 : index
    %c0_22 = arith.constant 0 : index
    %28 = vector.load %arg6[%c1_20, %c0_21, %c0_22] : memref<4x8x8xf32, #tpu.memory_space<vmem>>, vector<1x8x8xf32>
    %29 = vector.shape_cast %28 : vector<1x8x8xf32> to vector<8x8xf32>
    %30 = vector.shape_cast %27 : vector<8x8xf32> to vector<1x8x8xf32>
    tpu.vector_store %arg6[%c1_20, %c0_21, %c0_22], %30 {strides = array<i32>} : memref<4x8x8xf32, #tpu.memory_space<vmem>>, vector<1x8x8xf32>,
    %31 = vector.extract_strided_slice %26 {offsets = [0, 8], sizes = [8, 8], strides = [1, 1]} : vector<8x32xf32> to vector<8x8xf32>
    %c1_23 = arith.constant 1 : index
    %c0_24 = arith.constant 0 : index
    %c0_25 = arith.constant 0 : index
    %c0_26 = arith.constant 0 : index
    %32 = vector.load %arg7[%c1_23, %c0_24, %c0_25, %c0_26] : memref<4x3x8x8xf32, #tpu.memory_space<vmem>>, vector<1x1x8x8xf32>
    %33 = vector.shape_cast %32 : vector<1x1x8x8xf32> to vector<8x8xf32>
    %34 = vector.shape_cast %31 : vector<8x8xf32> to vector<1x1x8x8xf32>
    tpu.vector_store %arg7[%c1_23, %c0_24, %c0_25, %c0_26], %34 {strides = array<i32>} : memref<4x3x8x8xf32, #tpu.memory_space<vmem>>, vector<1x1x8x8xf32>,
    %35 = vector.extract_strided_slice %26 {offsets = [0, 16], sizes = [8, 8], strides = [1, 1]} : vector<8x32xf32> to vector<8x8xf32>
    %c1_27 = arith.constant 1 : index
    %c1_28 = arith.constant 1 : index
    %c0_29 = arith.constant 0 : index
    %c0_30 = arith.constant 0 : index
    %36 = vector.load %arg7[%c1_27, %c1_28, %c0_29, %c0_30] : memref<4x3x8x8xf32, #tpu.memory_space<vmem>>, vector<1x1x8x8xf32>
    %37 = vector.shape_cast %36 : vector<1x1x8x8xf32> to vector<8x8xf32>
    %38 = vector.shape_cast %35 : vector<8x8xf32> to vector<1x1x8x8xf32>
    tpu.vector_store %arg7[%c1_27, %c1_28, %c0_29, %c0_30], %38 {strides = array<i32>} : memref<4x3x8x8xf32, #tpu.memory_space<vmem>>, vector<1x1x8x8xf32>,
    %39 = vector.extract_strided_slice %26 {offsets = [0, 24], sizes = [8, 8], strides = [1, 1]} : vector<8x32xf32> to vector<8x8xf32>
    %c1_31 = arith.constant 1 : index
    %c2_32 = arith.constant 2 : index
    %c0_33 = arith.constant 0 : index
    %c0_34 = arith.constant 0 : index
    %40 = vector.load %arg7[%c1_31, %c2_32, %c0_33, %c0_34] : memref<4x3x8x8xf32, #tpu.memory_space<vmem>>, vector<1x1x8x8xf32>
    %41 = vector.shape_cast %40 : vector<1x1x8x8xf32> to vector<8x8xf32>
    %42 = vector.shape_cast %39 : vector<8x8xf32> to vector<1x1x8x8xf32>
    tpu.vector_store %arg7[%c1_31, %c2_32, %c0_33, %c0_34], %42 {strides = array<i32>} : memref<4x3x8x8xf32, #tpu.memory_space<vmem>>, vector<1x1x8x8xf32>,
    %43 = vector.extract_strided_slice %8 {offsets = [16, 0], sizes = [8, 32], strides = [1, 1]} : vector<32x32xf32> to vector<8x32xf32>
    %44 = vector.extract_strided_slice %43 {offsets = [0, 0], sizes = [8, 8], strides = [1, 1]} : vector<8x32xf32> to vector<8x8xf32>
    %c2_35 = arith.constant 2 : index
    %c0_36 = arith.constant 0 : index
    %c0_37 = arith.constant 0 : index
    %45 = vector.load %arg6[%c2_35, %c0_36, %c0_37] : memref<4x8x8xf32, #tpu.memory_space<vmem>>, vector<1x8x8xf32>
    %46 = vector.shape_cast %45 : vector<1x8x8xf32> to vector<8x8xf32>
    %47 = vector.shape_cast %44 : vector<8x8xf32> to vector<1x8x8xf32>
    tpu.vector_store %arg6[%c2_35, %c0_36, %c0_37], %47 {strides = array<i32>} : memref<4x8x8xf32, #tpu.memory_space<vmem>>, vector<1x8x8xf32>,
    %48 = vector.extract_strided_slice %43 {offsets = [0, 8], sizes = [8, 8], strides = [1, 1]} : vector<8x32xf32> to vector<8x8xf32>
    %c2_38 = arith.constant 2 : index
    %c0_39 = arith.constant 0 : index
    %c0_40 = arith.constant 0 : index
    %c0_41 = arith.constant 0 : index
    %49 = vector.load %arg7[%c2_38, %c0_39, %c0_40, %c0_41] : memref<4x3x8x8xf32, #tpu.memory_space<vmem>>, vector<1x1x8x8xf32>
    %50 = vector.shape_cast %49 : vector<1x1x8x8xf32> to vector<8x8xf32>
    %51 = vector.shape_cast %48 : vector<8x8xf32> to vector<1x1x8x8xf32>
    tpu.vector_store %arg7[%c2_38, %c0_39, %c0_40, %c0_41], %51 {strides = array<i32>} : memref<4x3x8x8xf32, #tpu.memory_space<vmem>>, vector<1x1x8x8xf32>,
    %52 = vector.extract_strided_slice %43 {offsets = [0, 16], sizes = [8, 8], strides = [1, 1]} : vector<8x32xf32> to vector<8x8xf32>
    %c2_42 = arith.constant 2 : index
    %c1_43 = arith.constant 1 : index
    %c0_44 = arith.constant 0 : index
    %c0_45 = arith.constant 0 : index
    %53 = vector.load %arg7[%c2_42, %c1_43, %c0_44, %c0_45] : memref<4x3x8x8xf32, #tpu.memory_space<vmem>>, vector<1x1x8x8xf32>
    %54 = vector.shape_cast %53 : vector<1x1x8x8xf32> to vector<8x8xf32>
    %55 = vector.shape_cast %52 : vector<8x8xf32> to vector<1x1x8x8xf32>
    tpu.vector_store %arg7[%c2_42, %c1_43, %c0_44, %c0_45], %55 {strides = array<i32>} : memref<4x3x8x8xf32, #tpu.memory_space<vmem>>, vector<1x1x8x8xf32>,
    %56 = vector.extract_strided_slice %43 {offsets = [0, 24], sizes = [8, 8], strides = [1, 1]} : vector<8x32xf32> to vector<8x8xf32>
    %c2_46 = arith.constant 2 : index
    %c2_47 = arith.constant 2 : index
    %c0_48 = arith.constant 0 : index
    %c0_49 = arith.constant 0 : index
    %57 = vector.load %arg7[%c2_46, %c2_47, %c0_48, %c0_49] : memref<4x3x8x8xf32, #tpu.memory_space<vmem>>, vector<1x1x8x8xf32>
    %58 = vector.shape_cast %57 : vector<1x1x8x8xf32> to vector<8x8xf32>
    %59 = vector.shape_cast %56 : vector<8x8xf32> to vector<1x1x8x8xf32>
    tpu.vector_store %arg7[%c2_46, %c2_47, %c0_48, %c0_49], %59 {strides = array<i32>} : memref<4x3x8x8xf32, #tpu.memory_space<vmem>>, vector<1x1x8x8xf32>,
    %60 = vector.extract_strided_slice %8 {offsets = [24, 0], sizes = [8, 32], strides = [1, 1]} : vector<32x32xf32> to vector<8x32xf32>
    %61 = vector.extract_strided_slice %60 {offsets = [0, 0], sizes = [8, 8], strides = [1, 1]} : vector<8x32xf32> to vector<8x8xf32>
    %c3 = arith.constant 3 : index
    %c0_50 = arith.constant 0 : index
    %c0_51 = arith.constant 0 : index
    %62 = vector.load %arg6[%c3, %c0_50, %c0_51] : memref<4x8x8xf32, #tpu.memory_space<vmem>>, vector<1x8x8xf32>
    %63 = vector.shape_cast %62 : vector<1x8x8xf32> to vector<8x8xf32>
    %64 = vector.shape_cast %61 : vector<8x8xf32> to vector<1x8x8xf32>
    tpu.vector_store %arg6[%c3, %c0_50, %c0_51], %64 {strides = array<i32>} : memref<4x8x8xf32, #tpu.memory_space<vmem>>, vector<1x8x8xf32>,
    %65 = vector.extract_strided_slice %60 {offsets = [0, 8], sizes = [8, 8], strides = [1, 1]} : vector<8x32xf32> to vector<8x8xf32>
    %c3_52 = arith.constant 3 : index
    %c0_53 = arith.constant 0 : index
    %c0_54 = arith.constant 0 : index
    %c0_55 = arith.constant 0 : index
    %66 = vector.load %arg7[%c3_52, %c0_53, %c0_54, %c0_55] : memref<4x3x8x8xf32, #tpu.memory_space<vmem>>, vector<1x1x8x8xf32>
    %67 = vector.shape_cast %66 : vector<1x1x8x8xf32> to vector<8x8xf32>
    %68 = vector.shape_cast %65 : vector<8x8xf32> to vector<1x1x8x8xf32>
    tpu.vector_store %arg7[%c3_52, %c0_53, %c0_54, %c0_55], %68 {strides = array<i32>} : memref<4x3x8x8xf32, #tpu.memory_space<vmem>>, vector<1x1x8x8xf32>,
    %69 = vector.extract_strided_slice %60 {offsets = [0, 16], sizes = [8, 8], strides = [1, 1]} : vector<8x32xf32> to vector<8x8xf32>
    %c3_56 = arith.constant 3 : index
    %c1_57 = arith.constant 1 : index
    %c0_58 = arith.constant 0 : index
    %c0_59 = arith.constant 0 : index
    %70 = vector.load %arg7[%c3_56, %c1_57, %c0_58, %c0_59] : memref<4x3x8x8xf32, #tpu.memory_space<vmem>>, vector<1x1x8x8xf32>
    %71 = vector.shape_cast %70 : vector<1x1x8x8xf32> to vector<8x8xf32>
    %72 = vector.shape_cast %69 : vector<8x8xf32> to vector<1x1x8x8xf32>
    tpu.vector_store %arg7[%c3_56, %c1_57, %c0_58, %c0_59], %72 {strides = array<i32>} : memref<4x3x8x8xf32, #tpu.memory_space<vmem>>, vector<1x1x8x8xf32>,
    %73 = vector.extract_strided_slice %60 {offsets = [0, 24], sizes = [8, 8], strides = [1, 1]} : vector<8x32xf32> to vector<8x8xf32>
    %c3_60 = arith.constant 3 : index
    %c2_61 = arith.constant 2 : index
    %c0_62 = arith.constant 0 : index
    %c0_63 = arith.constant 0 : index
    %74 = vector.load %arg7[%c3_60, %c2_61, %c0_62, %c0_63] : memref<4x3x8x8xf32, #tpu.memory_space<vmem>>, vector<1x1x8x8xf32>
    %75 = vector.shape_cast %74 : vector<1x1x8x8xf32> to vector<8x8xf32>
    %76 = vector.shape_cast %73 : vector<8x8xf32> to vector<1x1x8x8xf32>
    tpu.vector_store %arg7[%c3_60, %c2_61, %c0_62, %c0_63], %76 {strides = array<i32>} : memref<4x3x8x8xf32, #tpu.memory_space<vmem>>, vector<1x1x8x8xf32>,
    return
  }
  func.func @transform_0(%arg0: i32, %arg1: i32, %arg2: i32) -> (i32, i32) {
    %c0_i32 = arith.constant 0 : i32
    %c0_i32_0 = arith.constant 0 : i32
    %c0_i32_1 = arith.constant 0 : i32
    return %c0_i32, %c0_i32_0 : i32, i32
  }
  func.func @transform_1(%arg0: i32, %arg1: i32, %arg2: i32) -> (i32, i32) {
    %c0_i32 = arith.constant 0 : i32
    %c0_i32_0 = arith.constant 0 : i32
    %c0_i32_1 = arith.constant 0 : i32
    return %c0_i32, %c0_i32_0 : i32, i32
  }
  func.func @transform_2(%arg0: i32, %arg1: i32, %arg2: i32) -> (i32, i32, i32) {
    %c0_i32 = arith.constant 0 : i32
    %c0_i32_0 = arith.constant 0 : i32
    return %arg0, %arg1, %c0_i32 : i32, i32, i32
  }
  func.func @transform_3(%arg0: i32, %arg1: i32, %arg2: i32) -> (i32, i32, i32) {
    %c0_i32 = arith.constant 0 : i32
    return %arg0, %arg1, %arg2 : i32, i32, i32
  }
  func.func @transform_4(%arg0: i32, %arg1: i32, %arg2: i32) -> (i32, i32, i32, i32) {
    %c0_i32 = arith.constant 0 : i32
    %c0_i32_0 = arith.constant 0 : i32
    return %arg0, %c0_i32, %arg1, %arg2 : i32, i32, i32, i32
  }
}

</mosaic_0001>

<llo_original>
// kernel: tpu_custom_call.1
$region0: #{tpu_custom_call.1}
  #allocation0 [shape = 'u32[]', space=smem, size = 0x4, offset = 0x4, fixed_abs, tag = 'smem constant byte address 0x4 - core index']
  #allocation1 [shape = 'u32[144,128]{1,0:T(1,128)}', space=vmem, size = 0x12000, scoped, tag = 'internal scratch']
  %s0 = inlined_call_operand.hbm [shape: f32[16,32], index: 0, kind: input, shape index: {}]
  %s1 = inlined_call_operand.hbm [shape: f32[16,32], index: 1, kind: input, shape index: {}]
  %s2 = inlined_call_operand.hbm [shape: f32[8,8,32], index: 2, kind: input, shape index: {}]
  %s3 = inlined_call_operand.hbm [shape: f32[8,8,8], index: 3, kind: output, shape index: {0}]
  %s4 = inlined_call_operand.hbm [shape: f32[8,3,8,8], index: 4, kind: output, shape index: {1}]
  %5 = xla_tuple %s3, %s4
  %s6 = sld [smem:[#allocation0]]
  $region65: #{tpu_custom_call.1} parent=0
    _
  %s8 = ssub.s32 1, %s6
  %s9 = scalar_select 0, %s8, %s6
  $region1: #{tpu_custom_call.1} parent=0
    #allocation2 [shape = 'u8[8192]{0}', space=vmem, size = 0x2000, scoped, tag = 'input window, operand 0, single buffered']
    #allocation3 [shape = 's32[2]{0}', space=sflag, size = 0x8, scoped, tag = 'scoped memory for tpu_custom_call.1']
    #allocation4 [shape = 's32[2]{0}', space=sflag, size = 0x8, scoped, tag = 'scoped memory for tpu_custom_call.1']
    #allocation5 [shape = 'u8[8192]{0}', space=vmem, size = 0x2000, scoped, tag = 'input window, operand 1, single buffered']
    #allocation6 [shape = 's32[1]{0}', space=sflag, size = 0x4, scoped, tag = 'scoped memory for tpu_custom_call.1']
    #allocation7 [shape = 'u8[32768]{0}', space=vmem, size = 0x8000, scoped, tag = 'input window, operand 2']
    #allocation8 [shape = 'u8[32768]{0}', space=vmem, size = 0x8000, scoped, tag = 'output window, operand 0']
    #allocation9 [shape = 'u8[98304]{0}', space=vmem, size = 0x18000, scoped, tag = 'output window, operand 1']
    #allocation10 [shape = 's32[2]{0}', space=sflag, size = 0x8, scoped, tag = 'scoped memory for tpu_custom_call.1']
    %10 = vsyncpa [#allocation3], 0
    %11 = vsyncpa [#allocation6], 0
    %12 = vsyncpa [#allocation4], 0
    %s13 = scalar_lea.sflag [#allocation4], 1
    %14 = vsyncpa %s13, 0
    %15 = vsyncpa [#allocation10], 0
    %s16 = scalar_lea.sflag [#allocation10], 1
    %17 = vsyncpa %s16, 0
    loop: start=0, step=1, limit=4
    $region2: #{tpu_custom_call.1} parent=1 // loop_pre_header
      _
    $region3: #{tpu_custom_call.1} parent=1 // loop_header
      %s19 = sphi 0, %s23
      %p20 = scmp.ge.s32.totalorder %s19, 4
      %s26 = sphi 0, %s45
      %s27 = sphi 0, %s41
      %s28 = sphi 0, %s37
      %s29 = sphi 0, %s26
      %s30 = sphi 0, %s27
      %s31 = sphi 0, %s28
      %s32 = sphi 0, %s29
      %s33 = sphi 0, %s30
      %s34 = sphi 0, %s31
      %s46 = sphi 0, %s46
      %s48 = sphi 0, %s46
      %s49 = sphi 0, %s48
      %s63 = sphi 0, %s49
      %s67 = sphi 0, %s67
      %s69 = sphi 0, %s67
      %s70 = sphi 0, %s69
      %s84 = sphi 0, %s70
      %s92 = sphi 0, %s94
      %s95 = sphi 0, %s92
      %s96 = sphi 0, %s95
      %s112 = sphi 0, %s96
      %s122 = sphi 0, %s124
      %s125 = sphi 0, %s122
      %s126 = sphi 0, %s125
      %s142 = sphi 0, %s126
      %s152 = sphi 0, %s154
      %s155 = sphi 0, %s152
      %s156 = sphi 0, %s155
      %s172 = sphi 0, %s156
    $region4: #{tpu_custom_call.1} parent=1 // loop_header_branch
      %22 = sbr.rel (%p20) target = $region8
    $region5: #{tpu_custom_call.1} parent=1 // loop_body
      %s24 = ssub.s32 %s19, 1
      %s25 = ssub.s32 %s19, 2
      %s35 = sadd.s32 1, %s28
      %p36 = scmp.ge.s32.totalorder %s35, 1
      %s37 = scalar_select %p36, 0, %s35
      %s38 = sadd.s32 1, %s27
      %s39 = scalar_select %p36, %s38, %s27
      %p40 = scmp.ge.s32.totalorder %s39, 1
      %s41 = scalar_select %p40, 0, %s39
      %s42 = sadd.s32 1, %s26
      %s43 = scalar_select %p40, %s42, %s26
      %p44 = scmp.ge.s32.totalorder %s43, 2
      %s45 = scalar_select %p44, 0, %s43
      %s47 = sadd.s32 %s46, 1
      %p50 = scmp.eq.s32.totalorder %s19, 1
      %p51 = scmp.ne.s32.totalorder %s46, %s48
      %p52 = scmp.eq.s32.totalorder %s19, 0
      %p53 = por %p51, %p52
      %p54 = scmp.ne.s32.totalorder %s46, %s48
      %p55 = scmp.eq.s32.totalorder %s24, 1
      %p56 = por %p54, %p55
      %p57 = scmp.ne.s32.totalorder %s48, %s49
      %p58 = scmp.eq.s32.totalorder %s24, 0
      %p59 = por %p57, %p58
      %p60 = scmp.ne.s32.totalorder %s48, %s49
      %p61 = scmp.eq.s32.totalorder %s25, 1
      %p62 = por %p60, %p61
      %p64 = scmp.ne.s32.totalorder %s49, %s63
      %p65 = scmp.eq.s32.totalorder %s25, 0
      %p66 = por %p64, %p65
      %s68 = sadd.s32 %s67, 1
      %p71 = scmp.eq.s32.totalorder %s19, 1
      %p72 = scmp.ne.s32.totalorder %s67, %s69
      %p73 = scmp.eq.s32.totalorder %s19, 0
      %p74 = por %p72, %p73
      %p75 = scmp.ne.s32.totalorder %s67, %s69
      %p76 = scmp.eq.s32.totalorder %s24, 1
      %p77 = por %p75, %p76
      %p78 = scmp.ne.s32.totalorder %s69, %s70
      %p79 = scmp.eq.s32.totalorder %s24, 0
      %p80 = por %p78, %p79
      %p81 = scmp.ne.s32.totalorder %s69, %s70
      %p82 = scmp.eq.s32.totalorder %s25, 1
      %p83 = por %p81, %p82
      %p85 = scmp.ne.s32.totalorder %s70, %s84
      %p86 = scmp.eq.s32.totalorder %s25, 0
      %p87 = por %p85, %p86
      %s88 = ssub.s32 %s26, %s45
      %s89 = ssub.s32 %s27, %s41
      %s90 = sor.u32 %s88, %s89
      %p91 = scmp.eq.s32.totalorder %s90, 0
      %s93 = sadd.s32 %s92, 1
      %s94 = scalar_select %p91, %s92, %s93
      %p97 = pneg %p91
      %p98 = scmp.eq.s32.totalorder %s19, 1
      %p99 = por %p97, %p98
      %p100 = scmp.ne.s32.totalorder %s92, %s95
      %p101 = scmp.eq.s32.totalorder %s19, 0
      %p102 = por %p100, %p101
      %p103 = scmp.ne.s32.totalorder %s92, %s95
      %p104 = scmp.eq.s32.totalorder %s24, 1
      %p105 = por %p103, %p104
      %p106 = scmp.ne.s32.totalorder %s95, %s96
      %p107 = scmp.eq.s32.totalorder %s24, 0
      %p108 = por %p106, %p107
      %p109 = scmp.ne.s32.totalorder %s95, %s96
      %p110 = scmp.eq.s32.totalorder %s25, 1
      %p111 = por %p109, %p110
      %p113 = scmp.ne.s32.totalorder %s96, %s112
      %p114 = scmp.eq.s32.totalorder %s25, 0
      %p115 = por %p113, %p114
      %s116 = ssub.s32 %s26, %s45
      %s117 = ssub.s32 %s27, %s41
      %s118 = sor.u32 %s116, %s117
      %s119 = ssub.s32 %s28, %s37
      %s120 = sor.u32 %s118, %s119
      %p121 = scmp.eq.s32.totalorder %s120, 0
      %s123 = sadd.s32 %s122, 1
      %s124 = scalar_select %p121, %s122, %s123
      %p127 = pneg %p121
      %p128 = scmp.eq.s32.totalorder %s19, 1
      %p129 = por %p127, %p128
      %p130 = scmp.ne.s32.totalorder %s122, %s125
      %p131 = scmp.eq.s32.totalorder %s19, 0
      %p132 = por %p130, %p131
      %p133 = scmp.ne.s32.totalorder %s122, %s125
      %p134 = scmp.eq.s32.totalorder %s24, 1
      %p135 = por %p133, %p134
      %p136 = scmp.ne.s32.totalorder %s125, %s126
      %p137 = scmp.eq.s32.totalorder %s24, 0
      %p138 = por %p136, %p137
      %p139 = scmp.ne.s32.totalorder %s125, %s126
      %p140 = scmp.eq.s32.totalorder %s25, 1
      %p141 = por %p139, %p140
      %p143 = scmp.ne.s32.totalorder %s126, %s142
      %p144 = scmp.eq.s32.totalorder %s25, 0
      %p145 = por %p143, %p144
      %s146 = ssub.s32 %s26, %s45
      %s147 = ssub.s32 %s27, %s41
      %s148 = sor.u32 %s146, %s147
      %s149 = ssub.s32 %s28, %s37
      %s150 = sor.u32 %s148, %s149
      %p151 = scmp.eq.s32.totalorder %s150, 0
      %s153 = sadd.s32 %s152, 1
      %s154 = scalar_select %p151, %s152, %s153
      %p157 = pneg %p151
      %p158 = scmp.eq.s32.totalorder %s19, 1
      %p159 = por %p157, %p158
      %p160 = scmp.ne.s32.totalorder %s152, %s155
      %p161 = scmp.eq.s32.totalorder %s19, 0
      %p162 = por %p160, %p161
      %p163 = scmp.ne.s32.totalorder %s152, %s155
      %p164 = scmp.eq.s32.totalorder %s24, 1
      %p165 = por %p163, %p164
      %p166 = scmp.ne.s32.totalorder %s155, %s156
      %p167 = scmp.eq.s32.totalorder %s24, 0
      %p168 = por %p166, %p167
      %p169 = scmp.ne.s32.totalorder %s155, %s156
      %p170 = scmp.eq.s32.totalorder %s25, 1
      %p171 = por %p169, %p170
      %p173 = scmp.ne.s32.totalorder %s156, %s172
      %p174 = scmp.eq.s32.totalorder %s25, 0
      %p175 = por %p173, %p174
      %p176 = scmp.le.s32.totalorder 1, %s19
      %p177 = scmp.lt.s32.totalorder %s19, 3
      %p178 = pnand %p176, %p177
      %p179 = pneg %p178
      // Predicated region
      $region9: #{tpu_custom_call.1} parent=5 // pred_check
        _
      $region10: #{tpu_custom_call.1} parent=5 // pred_check_branch
        %181 = sbr.rel (%p178) target = $region12
      $region11: #{tpu_custom_call.1} parent=5 // pred_region
        %s182 = ssub.s32 %s19, 1
        // Predicated region
        $region13: #{tpu_custom_call.1} parent=11 // pred_check
          %p183 = pneg %p59
        $region14: #{tpu_custom_call.1} parent=11 // pred_check_branch
          %185 = sbr.rel (%p183) target = $region16
        $region15: #{tpu_custom_call.1} parent=11 // pred_region
          %s187 = ssub.s32 256, 256
          %188 = vsyncadd [#allocation3], %s187
          %s189 = sshll.u32 [#allocation2], 4
          %s190 = int_to_ptr.vmem [resolvable:$true] %s189
          %195 = dma.hbm_to_vmem [thread:$0]  %s0, 256, %s190, [#allocation3], 128, 128, 8
        $region16: #{tpu_custom_call.1} parent=11 // pred_fallthru
          _
        // Predicated region
        $region17: #{tpu_custom_call.1} parent=11 // pred_check
          %p196 = pneg %p80
        $region18: #{tpu_custom_call.1} parent=11 // pred_check_branch
          %198 = sbr.rel (%p196) target = $region20
        $region19: #{tpu_custom_call.1} parent=11 // pred_region
          %s200 = ssub.s32 256, 256
          %201 = vsyncadd [#allocation6], %s200
          %s202 = sshll.u32 [#allocation5], 4
          %s203 = int_to_ptr.vmem [resolvable:$true] %s202
          %208 = dma.hbm_to_vmem [thread:$0]  %s1, 256, %s203, [#allocation6], 128, 128, 8
        $region20: #{tpu_custom_call.1} parent=11 // pred_fallthru
          _
      $region12: #{tpu_custom_call.1} parent=5 // pred_fallthru
        _
      %p209 = scmp.lt.s32.totalorder %s19, 2
      // Predicated region
      $region21: #{tpu_custom_call.1} parent=5 // pred_check
        %p210 = pneg %p209
      $region22: #{tpu_custom_call.1} parent=5 // pred_check_branch
        %212 = sbr.rel (%p210) target = $region24
      $region23: #{tpu_custom_call.1} parent=5 // pred_region
        // Predicated region
        $region25: #{tpu_custom_call.1} parent=23 // pred_check
          %p213 = pneg %p102
        $region26: #{tpu_custom_call.1} parent=23 // pred_check_branch
          %215 = sbr.rel (%p213) target = $region28
        $region27: #{tpu_custom_call.1} parent=23 // pred_region
          %s216 = sand.u32 %s19, 1
          %s217 = scalar_lea.sflag [#allocation3], %s216
          %s218 = sand.u32 %s92, 1
          %s219 = smul.addr %s218, 32
          %s220 = scalar_lea.vmem [#allocation7], %s219
          %s221 = smul.u32 4, %s26
          %s223 = ssub.s32 512, 512
          %224 = vsyncadd %s217, %s223
          %s225 = sadd.s32 %s27, %s221
          %s226 = smul.addr %s225, 128
          %s227 = scalar_lea.hbm %s2, %s226
          %s228 = sshll.u32 %s220, 4
          %s229 = int_to_ptr.vmem [resolvable:$true] %s228
          %234 = dma.hbm_to_vmem [thread:$0]  %s227, 512, %s229, %s217, 128, 128, 8
        $region28: #{tpu_custom_call.1} parent=23 // pred_fallthru
          _
      $region24: #{tpu_custom_call.1} parent=5 // pred_fallthru
        _
      %p235 = scmp.le.s32.totalorder 1, %s19
      %p236 = scmp.lt.s32.totalorder %s19, 3
      %p237 = pnand %p235, %p236
      %p238 = pneg %p237
      // Predicated region
      $region29: #{tpu_custom_call.1} parent=5 // pred_check
        _
      $region30: #{tpu_custom_call.1} parent=5 // pred_check_branch
        %240 = sbr.rel (%p237) target = $region32
      $region31: #{tpu_custom_call.1} parent=5 // pred_region
        %s241 = ssub.s32 %s19, 1
        // Predicated region
        $region33: #{tpu_custom_call.1} parent=31 // pred_check
          %p242 = pneg %p59
        $region34: #{tpu_custom_call.1} parent=31 // pred_check_branch
          %244 = sbr.rel (%p242) target = $region36
        $region35: #{tpu_custom_call.1} parent=31 // pred_region
          %245 = dma.done [#allocation3], 256
        $region36: #{tpu_custom_call.1} parent=31 // pred_fallthru
          _
        // Predicated region
        $region37: #{tpu_custom_call.1} parent=31 // pred_check
          %p246 = pneg %p80
        $region38: #{tpu_custom_call.1} parent=31 // pred_check_branch
          %248 = sbr.rel (%p246) target = $region40
        $region39: #{tpu_custom_call.1} parent=31 // pred_region
          %249 = dma.done [#allocation6], 256
        $region40: #{tpu_custom_call.1} parent=31 // pred_fallthru
          _
        %s250 = sand.u32 %s24, 1
        %s251 = scalar_lea.sflag [#allocation3], %s250
        %s252 = sand.u32 %s95, 1
        %s253 = smul.addr %s252, 32
        %s254 = scalar_lea.vmem [#allocation7], %s253
        // Predicated region
        $region41: #{tpu_custom_call.1} parent=31 // pred_check
          %p255 = pneg %p108
        $region42: #{tpu_custom_call.1} parent=31 // pred_check_branch
          %257 = sbr.rel (%p255) target = $region44
        $region43: #{tpu_custom_call.1} parent=31 // pred_region
          %258 = dma.done %s251, 512
        $region44: #{tpu_custom_call.1} parent=31 // pred_fallthru
          _
        %p259 = pneg %p59
        %p260 = pneg %p56
        %p261 = pneg %p80
        %p262 = pneg %p77
        %s263 = sand.u32 %s24, 1
        %s264 = scalar_lea.sflag [#allocation3], %s263
        %s265 = sand.u32 %s95, 1
        %s266 = smul.addr %s265, 32
        %s267 = scalar_lea.vmem [#allocation7], %s266
        %p268 = pneg %p108
        %p269 = pneg %p105
        %p270 = pneg %p138
        %p271 = pneg %p135
        %s272 = sand.u32 %s125, 1
        %s273 = scalar_lea.sflag [#allocation4], %s272
        %s274 = sand.u32 %s125, 1
        %s275 = smul.addr %s274, 32
        %s276 = scalar_lea.vmem [#allocation8], %s275
        %p277 = pneg %p168
        %p278 = pneg %p165
        %s279 = sand.u32 %s155, 1
        %s280 = scalar_lea.sflag [#allocation10], %s279
        %s281 = sand.u32 %s155, 1
        %s282 = smul.addr %s281, 96
        %s283 = scalar_lea.vmem [#allocation9], %s282
        %s284 = smul.u32 4, %s29
        %s285 = smul.u32 4, %s29
        %s286 = smul.u32 4, %s29
        %v287 = vld [vmem:[%s254] sm:$0xff]
        %v288 = vld [vmem:[%s254 + $0x8] sm:$0xff]
        %v289 = vld [vmem:[%s254 + $0x10] sm:$0xff]
        %v290 = vld [vmem:[%s254 + $0x18] sm:$0xff]
        %v291 = vld [vmem:[#allocation2] sm:$0xff]
        %v292 = vld [vmem:[#allocation2 + $0x8] sm:$0xff]
        %v293 = vld [vmem:[#allocation5] sm:$0xff]
        %v294 = vld [vmem:[#allocation5 + $0x8] sm:$0xff]
        %299 = vrot.lane.b32.xlu0 %v287, 112
        %v300 = vpop.permute.xlu0 %299
        %301 = vrot.lane.b32.xlu0 %v288, 112
        %v302 = vpop.permute.xlu0 %301
        %303 = vrot.lane.b32.xlu0 %v289, 112
        %v304 = vpop.permute.xlu0 %303
        %305 = vrot.lane.b32.xlu0 %v290, 112
        %v306 = vpop.permute.xlu0 %305
        %vm307 = vcmask 130048
        %v308 = vsel %vm307, %v300, 0
        %v310 = vsel %vm307, %v302, 0
        %v312 = vsel %vm307, %v304, 0
        %v314 = vsel %vm307, %v306, 0
        %316 = vmatprep.subr.mxu0 0.0
        %317 = vmatpush1.msra.mxu0 %v293
        %318 = vmatprep.subr.mxu0 0.0
        %319 = vmatpush1.msra.mxu0 %v294
        %320 = vmatprep.subr.mxu0 0.0
        %321 = vmatpush1.msra.mxu0 0.0
        %322 = vmatprep.subr.mxu0 0.0
        %323 = vmatpush1.msra.mxu0 0.0
        %324 = vmatprep.subr.mxu0 0.0
        %325 = vmatpush1.msra.mxu0 0.0
        %326 = vmatprep.subr.mxu0 0.0
        %327 = vmatpush1.msra.mxu0 0.0
        %328 = vmatprep.subr.mxu0 0.0
        %329 = vmatpush1.msra.mxu0 0.0
        %330 = vmatprep.subr.mxu0 0.0
        %331 = vmatpush1.msra.mxu0 0.0
        %332 = vmatprep.subr.mxu0 0.0
        %333 = vmatpush1.msra.mxu0 0.0
        %334 = vmatprep.subr.mxu0 0.0
        %335 = vmatpush1.msra.mxu0 0.0
        %336 = vmatprep.subr.mxu0 0.0
        %337 = vmatpush1.msra.mxu0 0.0
        %338 = vmatprep.subr.mxu0 0.0
        %339 = vmatpush1.msra.mxu0 0.0
        %340 = vmatprep.subr.mxu0 0.0
        %341 = vmatpush1.msra.mxu0 0.0
        %342 = vmatprep.subr.mxu0 0.0
        %343 = vmatpush1.msra.mxu0 0.0
        %344 = vmatprep.subr.mxu0 0.0
        %345 = vmatpush1.msra.mxu0 0.0
        %346 = vmatprep.subr.mxu0 0.0
        %347 = vmatpush1.msra.mxu0 0.0
        %348 = vmatprep.subr.mxu0 0.0
        %349 = vmatpush1.msra.mxu0 0.0
        %350 = vmatprep.subr.mxu0 0.0
        %351 = vmatpush1.msra.mxu0 0.0
        %352 = vmatprep.subr.mxu0 0.0
        %353 = vmatpush1.msra.mxu0 0.0
        %354 = vmatprep.subr.mxu0 0.0
        %355 = vmatpush1.msra.mxu0 0.0
        %356 = vmatprep.subr.mxu0 0.0
        %357 = vmatpush1.msra.mxu0 0.0
        %358 = vmatprep.subr.mxu0 0.0
        %359 = vmatpush1.msra.mxu0 0.0
        %360 = vmatprep.subr.mxu0 0.0
        %361 = vmatpush1.msra.mxu0 0.0
        %362 = vmatprep.subr.mxu0 0.0
        %363 = vmatpush1.msra.mxu0 0.0
        %364 = vmatprep.subr.mxu0 0.0
        %365 = vmatpush1.msra.mxu0 0.0
        %366 = vmatprep.subr.mxu0 0.0
        %367 = vmatpush1.msra.mxu0 0.0
        %368 = vmatprep.subr.mxu0 0.0
        %369 = vmatpush1.msra.mxu0 0.0
        %370 = vmatprep.subr.mxu0 0.0
        %371 = vmatpush1.msra.mxu0 0.0
        %372 = vmatprep.subr.mxu0 0.0
        %373 = vmatpush1.msra.mxu0 0.0
        %374 = vmatprep.subr.mxu0 0.0
        %375 = vmatpush1.msra.mxu0 0.0
        %376 = vmatprep.subr.mxu0 0.0
        %377 = vmatpush1.msra.mxu0 0.0
        %378 = vmatprep.subr.mxu0 0.0
        %379 = vmatpush1.msra.mxu0 0.0
        %380 = vmatprep.mubr.f32.mxu0 0.0
        %381 = vmatmul.mubr.f32.gmra.mrb[0].mxu0 %v308
        %v382 = vpop.f32.mrb[0].mxu0
        %v383 = vadd.f32 0.0, %v382
        %v384 = vpop.f32.mrb[0].mxu0
        %385 = vmatprep.mubr.f32.mxu0 0.0
        %386 = vmatmul.mubr.f32.gmra.mrb[0].mxu0 %v310
        %v387 = vpop.f32.mrb[0].mxu0
        %v388 = vadd.f32 0.0, %v387
        %v389 = vpop.f32.mrb[0].mxu0
        %390 = vmatprep.mubr.f32.mxu0 0.0
        %391 = vmatmul.mubr.f32.gmra.mrb[0].mxu0 %v312
        %v392 = vpop.f32.mrb[0].mxu0
        %v393 = vadd.f32 0.0, %v392
        %v394 = vpop.f32.mrb[0].mxu0
        %395 = vmatprep.mubr.f32.mxu0 0.0
        %396 = vmatmul.mubr.f32.gmra.mrb[0].mxu0 %v314
        %v397 = vpop.f32.mrb[0].mxu0
        %v398 = vadd.f32 0.0, %v397
        %v399 = vpop.f32.mrb[0].mxu0
        %400 = vdwg.mxu0
        %v401 = vsel %vm307, %v287, 0
        %v403 = vsel %vm307, %v288, 0
        %v405 = vsel %vm307, %v289, 0
        %v407 = vsel %vm307, %v290, 0
        %409 = vmatprep.subr.mxu0 0.0
        %410 = vmatpush1.msra.mxu0 %v291
        %411 = vmatprep.subr.mxu0 0.0
        %412 = vmatpush1.msra.mxu0 %v292
        %413 = vmatprep.subr.mxu0 0.0
        %414 = vmatpush1.msra.mxu0 0.0
        %415 = vmatprep.subr.mxu0 0.0
        %416 = vmatpush1.msra.mxu0 0.0
        %417 = vmatprep.subr.mxu0 0.0
        %418 = vmatpush1.msra.mxu0 0.0
        %419 = vmatprep.subr.mxu0 0.0
        %420 = vmatpush1.msra.mxu0 0.0
        %421 = vmatprep.subr.mxu0 0.0
        %422 = vmatpush1.msra.mxu0 0.0
        %423 = vmatprep.subr.mxu0 0.0
        %424 = vmatpush1.msra.mxu0 0.0
        %425 = vmatprep.subr.mxu0 0.0
        %426 = vmatpush1.msra.mxu0 0.0
        %427 = vmatprep.subr.mxu0 0.0
        %428 = vmatpush1.msra.mxu0 0.0
        %429 = vmatprep.subr.mxu0 0.0
        %430 = vmatpush1.msra.mxu0 0.0
        %431 = vmatprep.subr.mxu0 0.0
        %432 = vmatpush1.msra.mxu0 0.0
        %433 = vmatprep.subr.mxu0 0.0
        %434 = vmatpush1.msra.mxu0 0.0
        %435 = vmatprep.subr.mxu0 0.0
        %436 = vmatpush1.msra.mxu0 0.0
        %437 = vmatprep.subr.mxu0 0.0
        %438 = vmatpush1.msra.mxu0 0.0
        %439 = vmatprep.subr.mxu0 0.0
        %440 = vmatpush1.msra.mxu0 0.0
        %441 = vmatprep.subr.mxu0 0.0
        %442 = vmatpush1.msra.mxu0 0.0
        %443 = vmatprep.subr.mxu0 0.0
        %444 = vmatpush1.msra.mxu0 0.0
        %445 = vmatprep.subr.mxu0 0.0
        %446 = vmatpush1.msra.mxu0 0.0
        %447 = vmatprep.subr.mxu0 0.0
        %448 = vmatpush1.msra.mxu0 0.0
        %449 = vmatprep.subr.mxu0 0.0
        %450 = vmatpush1.msra.mxu0 0.0
        %451 = vmatprep.subr.mxu0 0.0
        %452 = vmatpush1.msra.mxu0 0.0
        %453 = vmatprep.subr.mxu0 0.0
        %454 = vmatpush1.msra.mxu0 0.0
        %455 = vmatprep.subr.mxu0 0.0
        %456 = vmatpush1.msra.mxu0 0.0
        %457 = vmatprep.subr.mxu0 0.0
        %458 = vmatpush1.msra.mxu0 0.0
        %459 = vmatprep.subr.mxu0 0.0
        %460 = vmatpush1.msra.mxu0 0.0
        %461 = vmatprep.subr.mxu0 0.0
        %462 = vmatpush1.msra.mxu0 0.0
        %463 = vmatprep.subr.mxu0 0.0
        %464 = vmatpush1.msra.mxu0 0.0
        %465 = vmatprep.subr.mxu0 0.0
        %466 = vmatpush1.msra.mxu0 0.0
        %467 = vmatprep.subr.mxu0 0.0
        %468 = vmatpush1.msra.mxu0 0.0
        %469 = vmatprep.subr.mxu0 0.0
        %470 = vmatpush1.msra.mxu0 0.0
        %471 = vmatprep.subr.mxu0 0.0
        %472 = vmatpush1.msra.mxu0 0.0
        %473 = vmatprep.mubr.f32.mxu0 0.0
        %474 = vmatmul.mubr.f32.gmra.mrb[0].mxu0 %v401
        %v475 = vpop.f32.mrb[0].mxu0
        %v476 = vadd.f32 %v383, %v475
        %v477 = vpop.f32.mrb[0].mxu0
        %478 = vmatprep.mubr.f32.mxu0 0.0
        %479 = vmatmul.mubr.f32.gmra.mrb[0].mxu0 %v403
        %v480 = vpop.f32.mrb[0].mxu0
        %v481 = vadd.f32 %v388, %v480
        %v482 = vpop.f32.mrb[0].mxu0
        %483 = vmatprep.mubr.f32.mxu0 0.0
        %484 = vmatmul.mubr.f32.gmra.mrb[0].mxu0 %v405
        %v485 = vpop.f32.mrb[0].mxu0
        %v486 = vadd.f32 %v393, %v485
        %v487 = vpop.f32.mrb[0].mxu0
        %488 = vmatprep.mubr.f32.mxu0 0.0
        %489 = vmatmul.mubr.f32.gmra.mrb[0].mxu0 %v407
        %v490 = vpop.f32.mrb[0].mxu0
        %v491 = vadd.f32 %v398, %v490
        %v492 = vpop.f32.mrb[0].mxu0
        %493 = vdwg.mxu0
        %vm494 = vcmask 64512
        %495 = vst.msk [vmem:[%s276] sm:$0xff] %vm494, %v476
        %497 = vrot.lane.b32.xlu0 %v476, 120
        %v498 = vpop.permute.xlu0 %497
        %500 = vst.msk [vmem:[%s283] sm:$0xff] %vm494, %v498
        %501 = vrot.lane.b32.xlu0 %v476, 112
        %v502 = vpop.permute.xlu0 %501
        %s504 = scalar_lea.vmem %s283, 8 [#allocation9]
        %505 = vst.msk [vmem:[%s504] sm:$0xff] %vm494, %v502
        %506 = vrot.lane.b32.xlu0 %v476, 104
        %v507 = vpop.permute.xlu0 %506
        %s509 = scalar_lea.vmem %s283, 16 [#allocation9]
        %510 = vst.msk [vmem:[%s509] sm:$0xff] %vm494, %v507
        %s511 = scalar_lea.vmem %s276, 8 [#allocation8]
        %512 = vst.msk [vmem:[%s511] sm:$0xff] %vm494, %v481
        %514 = vrot.lane.b32.xlu0 %v481, 120
        %v515 = vpop.permute.xlu0 %514
        %s517 = scalar_lea.vmem %s283, 24 [#allocation9]
        %518 = vst.msk [vmem:[%s517] sm:$0xff] %vm494, %v515
        %519 = vrot.lane.b32.xlu0 %v481, 112
        %v520 = vpop.permute.xlu0 %519
        %s522 = scalar_lea.vmem %s283, 32 [#allocation9]
        %523 = vst.msk [vmem:[%s522] sm:$0xff] %vm494, %v520
        %524 = vrot.lane.b32.xlu0 %v481, 104
        %v525 = vpop.permute.xlu0 %524
        %s527 = scalar_lea.vmem %s283, 40 [#allocation9]
        %528 = vst.msk [vmem:[%s527] sm:$0xff] %vm494, %v525
        %s529 = scalar_lea.vmem %s276, 16 [#allocation8]
        %530 = vst.msk [vmem:[%s529] sm:$0xff] %vm494, %v486
        %532 = vrot.lane.b32.xlu0 %v486, 120
        %v533 = vpop.permute.xlu0 %532
        %s535 = scalar_lea.vmem %s283, 48 [#allocation9]
        %536 = vst.msk [vmem:[%s535] sm:$0xff] %vm494, %v533
        %537 = vrot.lane.b32.xlu0 %v486, 112
        %v538 = vpop.permute.xlu0 %537
        %s540 = scalar_lea.vmem %s283, 56 [#allocation9]
        %541 = vst.msk [vmem:[%s540] sm:$0xff] %vm494, %v538
        %542 = vrot.lane.b32.xlu0 %v486, 104
        %v543 = vpop.permute.xlu0 %542
        %s545 = scalar_lea.vmem %s283, 64 [#allocation9]
        %546 = vst.msk [vmem:[%s545] sm:$0xff] %vm494, %v543
        %s547 = scalar_lea.vmem %s276, 24 [#allocation8]
        %548 = vst.msk [vmem:[%s547] sm:$0xff] %vm494, %v491
        %550 = vrot.lane.b32.xlu0 %v491, 120
        %v551 = vpop.permute.xlu0 %550
        %s553 = scalar_lea.vmem %s283, 72 [#allocation9]
        %554 = vst.msk [vmem:[%s553] sm:$0xff] %vm494, %v551
        %555 = vrot.lane.b32.xlu0 %v491, 112
        %v556 = vpop.permute.xlu0 %555
        %s558 = scalar_lea.vmem %s283, 80 [#allocation9]
        %559 = vst.msk [vmem:[%s558] sm:$0xff] %vm494, %v556
        %560 = vrot.lane.b32.xlu0 %v491, 104
        %v561 = vpop.permute.xlu0 %560
        %s563 = scalar_lea.vmem %s283, 88 [#allocation9]
        %564 = vst.msk [vmem:[%s563] sm:$0xff] %vm494, %v561
        %s565 = sand.u32 %s125, 1
        %s566 = scalar_lea.sflag [#allocation4], %s565
        %s567 = sand.u32 %s125, 1
        %s568 = smul.addr %s567, 32
        %s569 = scalar_lea.vmem [#allocation8], %s568
        %s570 = sand.u32 %s155, 1
        %s571 = scalar_lea.sflag [#allocation10], %s570
        %s572 = sand.u32 %s155, 1
        %s573 = smul.addr %s572, 96
        %s574 = scalar_lea.vmem [#allocation9], %s573
        // Predicated region
        $region45: #{tpu_custom_call.1} parent=31 // pred_check
          %p575 = pneg %p135
        $region46: #{tpu_custom_call.1} parent=31 // pred_check_branch
          %577 = sbr.rel (%p575) target = $region48
        $region47: #{tpu_custom_call.1} parent=31 // pred_region
          %s578 = smul.u32 4, %s29
          %s580 = ssub.s32 512, 512
          %581 = vsyncadd %s566, %s580
          %s582 = sadd.s32 %s31, %s30
          %s583 = sadd.s32 %s582, %s578
          %s584 = smul.addr %s583, 128
          %s585 = scalar_lea.hbm %s3, %s584
          %s586 = sshll.u32 %s569, 4
          %s587 = int_to_ptr.vmem [resolvable:$true] %s586
          %592 = dma.vmem_to_hbm [thread:$0]  %s587, 512, %s585, %s566, 128, 128, 8
        $region48: #{tpu_custom_call.1} parent=31 // pred_fallthru
          _
        // Predicated region
        $region49: #{tpu_custom_call.1} parent=31 // pred_check
          %p593 = pneg %p165
        $region50: #{tpu_custom_call.1} parent=31 // pred_check_branch
          %595 = sbr.rel (%p593) target = $region52
        $region51: #{tpu_custom_call.1} parent=31 // pred_region
          %s596 = smul.u32 4, %s29
          %s598 = ssub.s32 1536, 1536
          %599 = vsyncadd %s571, %s598
          %s600 = sadd.s32 %s31, %s30
          %s601 = smul.addr %s596, 3
          %s602 = sadd.s32 %s600, %s601
          %s603 = smul.addr %s602, 128
          %s604 = scalar_lea.hbm %s4, %s603
          %s605 = sshll.u32 %s574, 4
          %s606 = int_to_ptr.vmem [resolvable:$true] %s605
          %611 = dma.vmem_to_hbm [thread:$0]  %s606, 1536, %s604, %s571, 128, 128, 8
        $region52: #{tpu_custom_call.1} parent=31 // pred_fallthru
          _
      $region32: #{tpu_custom_call.1} parent=5 // pred_fallthru
        _
      %p612 = scmp.le.s32.totalorder 2, %s19
      // Predicated region
      $region53: #{tpu_custom_call.1} parent=5 // pred_check
        %p613 = pneg %p612
      $region54: #{tpu_custom_call.1} parent=5 // pred_check_branch
        %615 = sbr.rel (%p613) target = $region56
      $region55: #{tpu_custom_call.1} parent=5 // pred_region
        %s616 = ssub.s32 %s19, 2
        // Predicated region
        $region57: #{tpu_custom_call.1} parent=55 // pred_check
          %p617 = pneg %p141
        $region58: #{tpu_custom_call.1} parent=55 // pred_check_branch
          %619 = sbr.rel (%p617) target = $region60
        $region59: #{tpu_custom_call.1} parent=55 // pred_region
          %s620 = sand.u32 %s126, 1
          %s621 = scalar_lea.sflag [#allocation4], %s620
          %s622 = sand.u32 %s126, 1
          %s623 = smul.addr %s622, 32
          %s624 = scalar_lea.vmem [#allocation8], %s623
          %625 = dma.done %s621, 512
        $region60: #{tpu_custom_call.1} parent=55 // pred_fallthru
          _
        // Predicated region
        $region61: #{tpu_custom_call.1} parent=55 // pred_check
          %p626 = pneg %p171
        $region62: #{tpu_custom_call.1} parent=55 // pred_check_branch
          %628 = sbr.rel (%p626) target = $region64
        $region63: #{tpu_custom_call.1} parent=55 // pred_region
          %s629 = sand.u32 %s156, 1
          %s630 = scalar_lea.sflag [#allocation10], %s629
          %s631 = sand.u32 %s156, 1
          %s632 = smul.addr %s631, 96
          %s633 = scalar_lea.vmem [#allocation9], %s632
          %634 = dma.done %s630, 1536
        $region64: #{tpu_custom_call.1} parent=55 // pred_fallthru
          _
      $region56: #{tpu_custom_call.1} parent=5 // pred_fallthru
        _
    $region6: #{tpu_custom_call.1} parent=1 // loop_footer
      %s23 = sadd.s32 1, %s19
    $region7: #{tpu_custom_call.1} parent=1 // loop_footer_branch
      %18 = sbr.rel target = $region3
    $region8: #{tpu_custom_call.1} parent=1 // loop_exit
      _
    %635 = vsyncpa [#allocation3], 1
    %s636 = scalar_lea.sflag [#allocation3], 1
    %637 = vsyncpa %s636, 1
    %638 = vsyncpa [#allocation6], 1
    %639 = vsyncpa [#allocation4], 1
    %s640 = scalar_lea.sflag [#allocation4], 1
    %641 = vsyncpa %s640, 1
    %642 = vsyncpa [#allocation10], 1
    %s643 = scalar_lea.sflag [#allocation10], 1
    %644 = vsyncpa %s643, 1

</llo_original>
